<compile_context>
chip_gen: v5e
topology: v5e:2x2
jax: 0.10.0
libtpu: 0.0.40
codegen_flags: <defaults>
</compile_context>

<pallas_src>
import functools

import jax
import jax.numpy as jnp
from jax import lax
from jax.experimental import pallas as pl
from jax.experimental.pallas import tpu as pltpu


# ---------------------------------------------------------------------------
# Pass 1: conv (banded MXU matmuls) + bias + per-band BN partial statistics.
# ---------------------------------------------------------------------------
def _conv_stats_kernel(x_ref, wband_ref, bias_ref, y_ref, s_ref, sq_ref, *, tb):
    """x_ref:     (1, H+2, (W+2)*Cin)  padded, lane-interleaved rows of one image
       wband_ref: (3, (W+2)*Cin, W*Cout) block-banded conv weights (one per kh)
       bias_ref:  (1, W*Cout)           conv bias broadcast over the lane layout
       y_ref:     (1, tb, W*Cout)       conv + bias rows for this band
       s_ref:     (1, 1, 1, W*Cout)     per-lane sum for this band
       sq_ref:    (1, 1, 1, W*Cout)     per-lane sum of squares for this band"""
    b = pl.program_id(1)
    row0 = pl.multiple_of(b * tb, tb)
    lanes_out = y_ref.shape[2]

    acc = jnp.zeros((tb, lanes_out), jnp.float32)
    for kh in range(3):  # 3 matmuls, contraction depth (W+2)*Cin (kw+Cin folded).
        rows = x_ref[0, pl.ds(row0 + kh, tb), :]        # ref-view load, no copies
        acc = acc + jnp.dot(rows, wband_ref[kh],
                            preferred_element_type=jnp.float32)

    y = acc + bias_ref[...]
    y_ref[0] = y.astype(y_ref.dtype)
    # BN statistics fused into the conv epilogue (per-lane partials; the tiny
    # lane -> channel reduction happens in the wrapper on (W, Cout) scalars).
    s_ref[0, 0] = jnp.sum(y, axis=0, keepdims=True)
    sq_ref[0, 0] = jnp.sum(y * y, axis=0, keepdims=True)


# ---------------------------------------------------------------------------
# Pass 2a: normalize (affine with batch stats) + ReLU, lane-dense in/out.
# ---------------------------------------------------------------------------
def _bn_act_kernel(y_ref, sc_ref, sh_ref, o_ref, *, activation):
    z = y_ref[0] * sc_ref[...] + sh_ref[...]
    if activation:
        z = jnp.maximum(z, 0.0)
    o_ref[0] = z.astype(o_ref.dtype)


# ---------------------------------------------------------------------------
# Pass 2b: normalize + ReLU + 2x2 max-pool (no strided slices: H window is an
# explicit axis of the block, W window is a contiguous lane-half split because
# the conv output lanes were permuted in the banded weights).
# ---------------------------------------------------------------------------
def _bn_act_pool_kernel(y_ref, sc_ref, sh_ref, o_ref, *, activation):
    y2 = y_ref[0]                                   # (tb, 2, W*Cout)
    a = y2[:, 0, :] * sc_ref[...] + sh_ref[...]
    c = y2[:, 1, :] * sc_ref[...] + sh_ref[...]
    zh = jnp.maximum(a, c)                          # 2x1 pool over row pairs
    if activation:                                  # ReLU commutes with max
        zh = jnp.maximum(zh, 0.0)
    half = zh.shape[-1] // 2
    zp = jnp.maximum(zh[:, :half], zh[:, half:])    # 1x2 pool over lane halves
    o_ref[0] = zp.astype(o_ref.dtype)


# ---------------------------------------------------------------------------
# Wrapper-side parameter prep (trace-time, tiny).
# ---------------------------------------------------------------------------
def _band_weights(w_oihw, W, maxpool):
    """(Cout, Cin, 3, 3) -> (3, (W+2)*Cin, W*Cout) block-banded matrices so that
    row (wp*Cin + ci) of band[kh] maps padded input column wp / channel ci to all
    output columns w with wp - w in {0,1,2} and output channel co."""
    Cout, Cin, KH, KW = w_oihw.shape
    wt = jnp.transpose(w_oihw, (2, 3, 1, 0)).astype(jnp.float32)  # (3,3,Cin,Cout)
    eye_w = jnp.eye(W, dtype=jnp.float32)
    bands = []
    for kh in range(KH):
        band = jnp.zeros(((W + 2) * Cin, W * Cout), jnp.float32)
        for kw in range(KW):
            blk = jnp.einsum("uv,io->uivo", eye_w, wt[kh, kw])
            blk = blk.reshape(W * Cin, W * Cout)
            band = band + jnp.pad(blk, ((kw * Cin, (KW - 1 - kw) * Cin), (0, 0)))
        bands.append(band)
    wband = jnp.stack(bands)                        # (3, (W+2)*Cin, W*Cout)
    if maxpool:
        # Pooling-friendly output-lane permutation: even-w columns occupy lanes
        # [0, W/2*Cout), odd-w the upper half.  Channel stays the inner index,
        # so per-channel bias / BN vectors and stats reductions are unchanged.
        wo = W // 2
        w_order = jnp.concatenate([2 * jnp.arange(wo), 2 * jnp.arange(wo) + 1])
        old_of_new = (w_order[:, None] * Cout +
                      jnp.arange(Cout)[None, :]).reshape(-1)
        wband = wband[:, :, old_of_new]
    return wband


def vgg_block(x_nchw, w_oihw, bias, gamma, beta, *,
              batch_norm=True, activation=True, maxpool=False, eps=1e-3):
    """Pallas implementation of VGG_Block.forward.  Input/output are NCHW."""
    N, Cin, H, W = x_nchw.shape
    Cout = w_oihw.shape[0]
    assert w_oihw.shape == (Cout, Cin, 3, 3)
    if maxpool:
        assert H % 2 == 0 and W % 2 == 0, "MaxPool2d(2,2) path requires even H, W"

    lanes_in = (W + 2) * Cin
    lanes_out = W * Cout
    out_dtype = x_nchw.dtype

    # Layout prep: transpose + pad + lane-interleave fuse into one XLA relayout.
    x = jnp.transpose(x_nchw, (0, 2, 3, 1)).astype(jnp.float32)     # NHWC
    x = jnp.pad(x, ((0, 0), (1, 1), (1, 1), (0, 0)))                # halo
    x = x.reshape(N, H + 2, lanes_in)                               # lane=(w,cin)

    wband = _band_weights(w_oihw, W, maxpool)
    bias_lane = jnp.tile(bias.astype(jnp.float32), W).reshape(1, lanes_out)

    cparams = pltpu.CompilerParams(
        dimension_semantics=("parallel", "parallel"),
        vmem_limit_bytes=32 * 1024 * 1024)

    # -------- pass 1: conv + bias + per-band BN partial sums ----------------
    tb1 = 8 if H % 8 == 0 else H
    hb1 = H // tb1
    y, psum, psumsq = pl.pallas_call(
        functools.partial(_conv_stats_kernel, tb=tb1),
        grid=(N, hb1),
        in_specs=[
            pl.BlockSpec((1, H + 2, lanes_in), lambda n, b: (n, 0, 0)),
            pl.BlockSpec((3, lanes_in, lanes_out), lambda n, b: (0, 0, 0)),
            pl.BlockSpec((1, lanes_out), lambda n, b: (0, 0)),
        ],
        out_specs=[
            pl.BlockSpec((1, tb1, lanes_out), lambda n, b: (n, b, 0)),
            pl.BlockSpec((1, 1, 1, lanes_out), lambda n, b: (n, b, 0, 0)),
            pl.BlockSpec((1, 1, 1, lanes_out), lambda n, b: (n, b, 0, 0)),
        ],
        out_shape=[
            jax.ShapeDtypeStruct((N, H, lanes_out), jnp.float32),
            jax.ShapeDtypeStruct((N, hb1, 1, lanes_out), jnp.float32),
            jax.ShapeDtypeStruct((N, hb1, 1, lanes_out), jnp.float32),
        ],
        compiler_params=cparams,
    )(x, wband, bias_lane)

    # -------- combine partial stats (tiny, plain JAX, all f32) --------------
    if batch_norm:
        cnt = float(N * H * W)
        ch_sum = psum.sum(axis=(0, 1, 2)).reshape(W, Cout).sum(axis=0)
        ch_sqsum = psumsq.sum(axis=(0, 1, 2)).reshape(W, Cout).sum(axis=0)
        mean = ch_sum / cnt
        var = jnp.maximum(ch_sqsum / cnt - mean * mean, 0.0)   # biased variance
        scale_c = gamma.astype(jnp.float32) * lax.rsqrt(var + eps)
        shift_c = beta.astype(jnp.float32) - mean * scale_c
    else:
        scale_c = jnp.ones((Cout,), jnp.float32)
        shift_c = jnp.zeros((Cout,), jnp.float32)
    scale_lane = jnp.tile(scale_c, W).reshape(1, lanes_out)
    shift_lane = jnp.tile(shift_c, W).reshape(1, lanes_out)

    # -------- pass 2: normalize + ReLU (+ 2x2 max-pool) ---------------------
    if maxpool:
        ho, wo = H // 2, W // 2
        lanes_pool = wo * Cout
        y4 = y.reshape(N, ho, 2, lanes_out)        # expose the H pool window
        tb2 = 8 if ho % 8 == 0 else ho
        hb2 = ho // tb2
        out2 = pl.pallas_call(
            functools.partial(_bn_act_pool_kernel, activation=activation),
            grid=(N, hb2),
            in_specs=[
                pl.BlockSpec((1, tb2, 2, lanes_out), lambda n, b: (n, b, 0, 0)),
                pl.BlockSpec((1, lanes_out), lambda n, b: (0, 0)),
                pl.BlockSpec((1, lanes_out), lambda n, b: (0, 0)),
            ],
            out_specs=pl.BlockSpec((1, tb2, lanes_pool), lambda n, b: (n, b, 0)),
            out_shape=jax.ShapeDtypeStruct((N, ho, lanes_pool), out_dtype),
            compiler_params=cparams,
        )(y4, scale_lane, shift_lane)
        out = out2.reshape(N, ho, wo, Cout)
    else:
        tb2 = 8 if H % 8 == 0 else H
        hb2 = H // tb2
        out2 = pl.pallas_call(
            functools.partial(_bn_act_kernel, activation=activation),
            grid=(N, hb2),
            in_specs=[
                pl.BlockSpec((1, tb2, lanes_out), lambda n, b: (n, b, 0)),
                pl.BlockSpec((1, lanes_out), lambda n, b: (0, 0)),
                pl.BlockSpec((1, lanes_out), lambda n, b: (0, 0)),
            ],
            out_specs=pl.BlockSpec((1, tb2, lanes_out), lambda n, b: (n, b, 0)),
            out_shape=jax.ShapeDtypeStruct((N, H, lanes_out), out_dtype),
            compiler_params=cparams,
        )(y, scale_lane, shift_lane)
        out = out2.reshape(N, H, W, Cout)

    return jnp.transpose(out, (0, 3, 1, 2))        # back to NCHW


# ---------------------------------------------------------------------------
# Pure-JAX reference (same semantics) for a sanity check.
# ---------------------------------------------------------------------------
def _reference(x_nchw, w_oihw, bias, gamma, beta, *,
               batch_norm=True, activation=True, maxpool=False, eps=1e-3):
    y = lax.conv_general_dilated(
        x_nchw.astype(jnp.float32), w_oihw.astype(jnp.float32),
        window_strides=(1, 1), padding=((1, 1), (1, 1)),
        dimension_numbers=("NCHW", "OIHW", "NCHW"))
    y = y + bias.reshape(1, -1, 1, 1)
    if batch_norm:
        mean = jnp.mean(y, axis=(0, 2, 3), keepdims=True)
        var = jnp.mean((y - mean) ** 2, axis=(0, 2, 3), keepdims=True)
        y = (y - mean) * lax.rsqrt(var + eps)
        y = y * gamma.reshape(1, -1, 1, 1) + beta.reshape(1, -1, 1, 1)
    if activation:
        y = jnp.maximum(y, 0.0)
    if maxpool:
        y = lax.reduce_window(y, -jnp.inf, lax.max,
                              (1, 1, 2, 2), (1, 1, 2, 2), "VALID")
    return y.astype(x_nchw.dtype)


if __name__ == "__main__":
    # Small shapes consistent with the module: batch=2, Cin=4, H=W=16, Cout=8.
    N, Cin, H, W, Cout = 2, 4, 16, 16, 8
    key = jax.random.PRNGKey(0)
    kx, kw_, kb, kg, kbe = jax.random.split(key, 5)

    x = jax.random.normal(kx, (N, Cin, H, W), dtype=jnp.float32)
    w = jax.random.normal(kw_, (Cout, Cin, 3, 3), dtype=jnp.float32) * 0.1
    b = jax.random.normal(kb, (Cout,), dtype=jnp.float32) * 0.1
    gamma = 1.0 + 0.1 * jax.random.normal(kg, (Cout,), dtype=jnp.float32)
    beta = 0.1 * jax.random.normal(kbe, (Cout,), dtype=jnp.float32)

    for mp in (False, True):  # default config + the maxpool variant
        fn = jax.jit(functools.partial(vgg_block, batch_norm=True,
                                       activation=True, maxpool=mp))
        out = jax.block_until_ready(fn(x, w, b, gamma, beta))
        ref = jax.block_until_ready(
            _reference(x, w, b, gamma, beta,
                       batch_norm=True, activation=True, maxpool=mp))
        assert out.shape == ref.shape, (out.shape, ref.shape)
        max_err = jnp.max(jnp.abs(out - ref))
        assert jnp.allclose(out, ref, atol=1e-3, rtol=1e-3), (
            f"mismatch (maxpool={mp}): max abs err {max_err:.3e}")

    print("KERNEL_OK")
</pallas_src>

<mosaic_0001>
module attributes {stable_mosaic.version = 11 : i64} {
  func.func @_conv_stats_kernel(%arg0: i32, %arg1: i32, %arg2: memref<1x18x72xf32, #tpu.memory_space<vmem>>, %arg3: memref<3x72x128xf32, #tpu.memory_space<vmem>>, %arg4: memref<1x128xf32, #tpu.memory_space<vmem>>, %arg5: memref<1x8x128xf32, #tpu.memory_space<vmem>>, %arg6: memref<1x1x1x128xf32, #tpu.memory_space<vmem>>, %arg7: memref<1x1x1x128xf32, #tpu.memory_space<vmem>>) attributes {dimension_semantics = [#tpu.dimension_semantics<parallel>, #tpu.dimension_semantics<parallel>], iteration_bounds = array<i64: 2, 2>, scalar_prefetch = 0 : i64, scratch_operands = 0 : i64, tpu.core_type = #tpu.core_type<tc>, window_params = [{transform_indices = @transform_0, window_bounds = array<i64: 1, 18, 72>}, {pipeline_mode = #tpu.pipeline_mode<synchronous>, transform_indices = @transform_1, window_bounds = array<i64: 3, 72, 128>}, {pipeline_mode = #tpu.pipeline_mode<synchronous>, transform_indices = @transform_2, window_bounds = array<i64: 1, 128>}, {transform_indices = @transform_3, window_bounds = array<i64: 1, 8, 128>}, {transform_indices = @transform_4, window_bounds = array<i64: 1, 1, 1, 128>}, {transform_indices = @transform_5, window_bounds = array<i64: 1, 1, 1, 128>}]} {
    %c8_i32 = arith.constant 8 : i32
    %0 = arith.muli %arg1, %c8_i32 : i32
    %1 = tpu.assume_multiple %0, 8 : i32
    %cst = arith.constant 0.000000e+00 : f32
    %2 = vector.broadcast %cst : f32 to vector<8x128xf32>
    %c0_i32 = arith.constant 0 : i32
    %3 = arith.addi %1, %c0_i32 : i32
    %c0 = arith.constant 0 : index
    %4 = arith.index_cast %3 : i32 to index
    %c0_0 = arith.constant 0 : index
    %5 = vector.load %arg2[%c0, %4, %c0_0] : memref<1x18x72xf32, #tpu.memory_space<vmem>>, vector<1x8x72xf32>
    %6 = vector.shape_cast %5 : vector<1x8x72xf32> to vector<8x72xf32>
    %c0_1 = arith.constant 0 : index
    %c0_2 = arith.constant 0 : index
    %c0_3 = arith.constant 0 : index
    %7 = vector.load %arg3[%c0_1, %c0_2, %c0_3] : memref<3x72x128xf32, #tpu.memory_space<vmem>>, vector<1x72x128xf32>
    %8 = vector.shape_cast %7 : vector<1x72x128xf32> to vector<72x128xf32>
    %cst_4 = arith.constant dense<0.000000e+00> : vector<8x128xf32>
    %9 = tpu.matmul %6, %8, %cst_4 {dimension_numbers = #tpu.dot_dimension_numbers<[1], [0], [0], [1], [0, 0, 1, 1], [], []>} : vector<8x72xf32>, vector<72x128xf32>, vector<8x128xf32> -> vector<8x128xf32>
    %10 = arith.addf %2, %9 : vector<8x128xf32>
    %c1_i32 = arith.constant 1 : i32
    %11 = arith.addi %1, %c1_i32 : i32
    %c0_5 = arith.constant 0 : index
    %12 = arith.index_cast %11 : i32 to index
    %c0_6 = arith.constant 0 : index
    %13 = vector.load %arg2[%c0_5, %12, %c0_6] : memref<1x18x72xf32, #tpu.memory_space<vmem>>, vector<1x8x72xf32>
    %14 = vector.shape_cast %13 : vector<1x8x72xf32> to vector<8x72xf32>
    %c1 = arith.constant 1 : index
    %c0_7 = arith.constant 0 : index
    %c0_8 = arith.constant 0 : index
    %15 = vector.load %arg3[%c1, %c0_7, %c0_8] : memref<3x72x128xf32, #tpu.memory_space<vmem>>, vector<1x72x128xf32>
    %16 = vector.shape_cast %15 : vector<1x72x128xf32> to vector<72x128xf32>
    %cst_9 = arith.constant dense<0.000000e+00> : vector<8x128xf32>
    %17 = tpu.matmul %14, %16, %cst_9 {dimension_numbers = #tpu.dot_dimension_numbers<[1], [0], [0], [1], [0, 0, 1, 1], [], []>} : vector<8x72xf32>, vector<72x128xf32>, vector<8x128xf32> -> vector<8x128xf32>
    %18 = arith.addf %10, %17 : vector<8x128xf32>
    %c2_i32 = arith.constant 2 : i32
    %19 = arith.addi %1, %c2_i32 : i32
    %c0_10 = arith.constant 0 : index
    %20 = arith.index_cast %19 : i32 to index
    %c0_11 = arith.constant 0 : index
    %21 = vector.load %arg2[%c0_10, %20, %c0_11] : memref<1x18x72xf32, #tpu.memory_space<vmem>>, vector<1x8x72xf32>
    %22 = vector.shape_cast %21 : vector<1x8x72xf32> to vector<8x72xf32>
    %c2 = arith.constant 2 : index
    %c0_12 = arith.constant 0 : index
    %c0_13 = arith.constant 0 : index
    %23 = vector.load %arg3[%c2, %c0_12, %c0_13] : memref<3x72x128xf32, #tpu.memory_space<vmem>>, vector<1x72x128xf32>
    %24 = vector.shape_cast %23 : vector<1x72x128xf32> to vector<72x128xf32>
    %cst_14 = arith.constant dense<0.000000e+00> : vector<8x128xf32>
    %25 = tpu.matmul %22, %24, %cst_14 {dimension_numbers = #tpu.dot_dimension_numbers<[1], [0], [0], [1], [0, 0, 1, 1], [], []>} : vector<8x72xf32>, vector<72x128xf32>, vector<8x128xf32> -> vector<8x128xf32>
    %26 = arith.addf %18, %25 : vector<8x128xf32>
    %c0_15 = arith.constant 0 : index
    %c0_16 = arith.constant 0 : index
    %27 = vector.load %arg4[%c0_15, %c0_16] : memref<1x128xf32, #tpu.memory_space<vmem>>, vector<1x128xf32>
    %28 = vector.broadcast %27 : vector<1x128xf32> to vector<8x128xf32>
    %29 = arith.addf %26, %28 : vector<8x128xf32>
    %c0_17 = arith.constant 0 : index
    %c0_18 = arith.constant 0 : index
    %c0_19 = arith.constant 0 : index
    %30 = vector.load %arg5[%c0_17, %c0_18, %c0_19] : memref<1x8x128xf32, #tpu.memory_space<vmem>>, vector<1x8x128xf32>
    %31 = vector.shape_cast %30 : vector<1x8x128xf32> to vector<8x128xf32>
    %32 = vector.shape_cast %29 : vector<8x128xf32> to vector<1x8x128xf32>
    tpu.vector_store %arg5[%c0_17, %c0_18, %c0_19], %32 {strides = array<i32>} : memref<1x8x128xf32, #tpu.memory_space<vmem>>, vector<1x8x128xf32>,
    %cst_20 = arith.constant dense<0.000000e+00> : vector<128xf32>
    %33 = vector.multi_reduction <add>, %29, %cst_20 [0] : vector<8x128xf32> to vector<128xf32>
    %34 = vector.shape_cast %33 : vector<128xf32> to vector<1x128xf32>
    %c0_21 = arith.constant 0 : index
    %c0_22 = arith.constant 0 : index
    %c0_23 = arith.constant 0 : index
    %c0_24 = arith.constant 0 : index
    %35 = vector.load %arg6[%c0_21, %c0_22, %c0_23, %c0_24] : memref<1x1x1x128xf32, #tpu.memory_space<vmem>>, vector<1x1x1x128xf32>
    %36 = vector.shape_cast %35 : vector<1x1x1x128xf32> to vector<1x128xf32>
    %37 = vector.shape_cast %34 : vector<1x128xf32> to vector<1x1x1x128xf32>
    tpu.vector_store %arg6[%c0_21, %c0_22, %c0_23, %c0_24], %37 {strides = array<i32>} : memref<1x1x1x128xf32, #tpu.memory_space<vmem>>, vector<1x1x1x128xf32>,
    %38 = arith.mulf %29, %29 : vector<8x128xf32>
    %cst_25 = arith.constant dense<0.000000e+00> : vector<128xf32>
    %39 = vector.multi_reduction <add>, %38, %cst_25 [0] : vector<8x128xf32> to vector<128xf32>
    %40 = vector.shape_cast %39 : vector<128xf32> to vector<1x128xf32>
    %c0_26 = arith.constant 0 : index
    %c0_27 = arith.constant 0 : index
    %c0_28 = arith.constant 0 : index
    %c0_29 = arith.constant 0 : index
    %41 = vector.load %arg7[%c0_26, %c0_27, %c0_28, %c0_29] : memref<1x1x1x128xf32, #tpu.memory_space<vmem>>, vector<1x1x1x128xf32>
    %42 = vector.shape_cast %41 : vector<1x1x1x128xf32> to vector<1x128xf32>
    %43 = vector.shape_cast %40 : vector<1x128xf32> to vector<1x1x1x128xf32>
    tpu.vector_store %arg7[%c0_26, %c0_27, %c0_28, %c0_29], %43 {strides = array<i32>} : memref<1x1x1x128xf32, #tpu.memory_space<vmem>>, vector<1x1x1x128xf32>,
    return
  }
  func.func @transform_0(%arg0: i32, %arg1: i32) -> (i32, i32, i32) {
    %c0_i32 = arith.constant 0 : i32
    %c0_i32_0 = arith.constant 0 : i32
    %c0_i32_1 = arith.constant 0 : i32
    return %arg0, %c0_i32, %c0_i32_0 : i32, i32, i32
  }
  func.func @transform_1(%arg0: i32, %arg1: i32) -> (i32, i32, i32) {
    %c0_i32 = arith.constant 0 : i32
    %c0_i32_0 = arith.constant 0 : i32
    %c0_i32_1 = arith.constant 0 : i32
    %c0_i32_2 = arith.constant 0 : i32
    return %c0_i32, %c0_i32_0, %c0_i32_1 : i32, i32, i32
  }
  func.func @transform_2(%arg0: i32, %arg1: i32) -> (i32, i32) {
    %c0_i32 = arith.constant 0 : i32
    %c0_i32_0 = arith.constant 0 : i32
    %c0_i32_1 = arith.constant 0 : i32
    return %c0_i32, %c0_i32_0 : i32, i32
  }
  func.func @transform_3(%arg0: i32, %arg1: i32) -> (i32, i32, i32) {
    %c0_i32 = arith.constant 0 : i32
    %c0_i32_0 = arith.constant 0 : i32
    return %arg0, %arg1, %c0_i32 : i32, i32, i32
  }
  func.func @transform_4(%arg0: i32, %arg1: i32) -> (i32, i32, i32, i32) {
    %c0_i32 = arith.constant 0 : i32
    %c0_i32_0 = arith.constant 0 : i32
    %c0_i32_1 = arith.constant 0 : i32
    return %arg0, %arg1, %c0_i32, %c0_i32_0 : i32, i32, i32, i32
  }
  func.func @transform_5(%arg0: i32, %arg1: i32) -> (i32, i32, i32, i32) {
    %c0_i32 = arith.constant 0 : i32
    %c0_i32_0 = arith.constant 0 : i32
    %c0_i32_1 = arith.constant 0 : i32
    return %arg0, %arg1, %c0_i32, %c0_i32_0 : i32, i32, i32, i32
  }
}

module attributes {stable_mosaic.version = 11 : i64} {
  func.func @_bn_act_kernel(%arg0: i32, %arg1: i32, %arg2: memref<1x8x128xf32, #tpu.memory_space<vmem>>, %arg3: memref<1x128xf32, #tpu.memory_space<vmem>>, %arg4: memref<1x128xf32, #tpu.memory_space<vmem>>, %arg5: memref<1x8x128xf32, #tpu.memory_space<vmem>>) attributes {dimension_semantics = [#tpu.dimension_semantics<parallel>, #tpu.dimension_semantics<parallel>], iteration_bounds = array<i64: 2, 2>, scalar_prefetch = 0 : i64, scratch_operands = 0 : i64, tpu.core_type = #tpu.core_type<tc>, window_params = [{transform_indices = @transform_0, window_bounds = array<i64: 1, 8, 128>}, {pipeline_mode = #tpu.pipeline_mode<synchronous>, transform_indices = @transform_1, window_bounds = array<i64: 1, 128>}, {pipeline_mode = #tpu.pipeline_mode<synchronous>, transform_indices = @transform_2, window_bounds = array<i64: 1, 128>}, {transform_indices = @transform_3, window_bounds = array<i64: 1, 8, 128>}]} {
    %c0 = arith.constant 0 : index
    %c0_0 = arith.constant 0 : index
    %c0_1 = arith.constant 0 : index
    %0 = vector.load %arg2[%c0, %c0_0, %c0_1] : memref<1x8x128xf32, #tpu.memory_space<vmem>>, vector<1x8x128xf32>
    %1 = vector.shape_cast %0 : vector<1x8x128xf32> to vector<8x128xf32>
    %c0_2 = arith.constant 0 : index
    %c0_3 = arith.constant 0 : index
    %2 = vector.load %arg3[%c0_2, %c0_3] : memref<1x128xf32, #tpu.memory_space<vmem>>, vector<1x128xf32>
    %3 = vector.broadcast %2 : vector<1x128xf32> to vector<8x128xf32>
    %4 = arith.mulf %1, %3 : vector<8x128xf32>
    %c0_4 = arith.constant 0 : index
    %c0_5 = arith.constant 0 : index
    %5 = vector.load %arg4[%c0_4, %c0_5] : memref<1x128xf32, #tpu.memory_space<vmem>>, vector<1x128xf32>
    %6 = vector.broadcast %5 : vector<1x128xf32> to vector<8x128xf32>
    %7 = arith.addf %4, %6 : vector<8x128xf32>
    %cst = arith.constant 0.000000e+00 : f32
    %8 = vector.broadcast %cst : f32 to vector<8x128xf32>
    %9 = arith.maximumf %7, %8 : vector<8x128xf32>
    %c0_6 = arith.constant 0 : index
    %c0_7 = arith.constant 0 : index
    %c0_8 = arith.constant 0 : index
    %10 = vector.load %arg5[%c0_6, %c0_7, %c0_8] : memref<1x8x128xf32, #tpu.memory_space<vmem>>, vector<1x8x128xf32>
    %11 = vector.shape_cast %10 : vector<1x8x128xf32> to vector<8x128xf32>
    %12 = vector.shape_cast %9 : vector<8x128xf32> to vector<1x8x128xf32>
    tpu.vector_store %arg5[%c0_6, %c0_7, %c0_8], %12 {strides = array<i32>} : memref<1x8x128xf32, #tpu.memory_space<vmem>>, vector<1x8x128xf32>,
    return
  }
  func.func @transform_0(%arg0: i32, %arg1: i32) -> (i32, i32, i32) {
    %c0_i32 = arith.constant 0 : i32
    %c0_i32_0 = arith.constant 0 : i32
    return %arg0, %arg1, %c0_i32 : i32, i32, i32
  }
  func.func @transform_1(%arg0: i32, %arg1: i32) -> (i32, i32) {
    %c0_i32 = arith.constant 0 : i32
    %c0_i32_0 = arith.constant 0 : i32
    %c0_i32_1 = arith.constant 0 : i32
    return %c0_i32, %c0_i32_0 : i32, i32
  }
  func.func @transform_2(%arg0: i32, %arg1: i32) -> (i32, i32) {
    %c0_i32 = arith.constant 0 : i32
    %c0_i32_0 = arith.constant 0 : i32
    %c0_i32_1 = arith.constant 0 : i32
    return %c0_i32, %c0_i32_0 : i32, i32
  }
  func.func @transform_3(%arg0: i32, %arg1: i32) -> (i32, i32, i32) {
    %c0_i32 = arith.constant 0 : i32
    %c0_i32_0 = arith.constant 0 : i32
    return %arg0, %arg1, %c0_i32 : i32, i32, i32
  }
}

</mosaic_0001>

<llo_original>
// kernel: tile.18
$region0: #{tile.18}
  #allocation0 [shape = 's32[1]{0}', space=sflag, size = 0x4, scoped, tag = 'scoped memory for tile.18']
  %s0 = inlined_call_operand.vmem [shape: f32[8], index: 0, kind: input, shape index: {}]
  %s1 = inlined_call_operand.vmem [shape: f32[16,8], index: 1, kind: output, shape index: {}]
  // Predicated region
  $region2: #{tile.18} parent=0 // pred_check
    _
  $region3: #{tile.18} parent=0 // pred_check_branch
    %3 = sbr.rel (0) target = $region5
  $region4: #{tile.18} parent=0 // pred_region
    _
  $region5: #{tile.18} parent=0 // pred_fallthru
    _
  %v4 = vld [vmem:[%s0] ss:$0 sm:$0xff]
  %5 = vst [vmem:[%s1] sm:$0xff] %v4
  %s6 = scalar_lea.vmem %s1, 8
  %7 = vst [vmem:[%s6] sm:$0xff] %v4

// kernel: tile.19
$region0: #{tile.19}
  %s0 = inlined_call_operand.vmem [shape: f32[16,8], index: 0, kind: input, shape index: {}]
  %s1 = inlined_call_operand.vmem [shape: f32[1,128], index: 1, kind: output, shape index: {}]
  $region1: #{tile.19} parent=0
    #allocation0 [shape = 'u8[4096]{0}', space=vmem, size = 0x1000, scoped, tag = 'scoped mem for output reshape']
    %v2 = vld [vmem:[%s0] sm:$0x1]
    %vm3 = vcmask 64512
    %4 = vst.msk [vmem:[#allocation0] sm:$0x1] %vm3, %v2
    %s5 = scalar_lea.vmem %s0, 15
    %v6 = vld [vmem:[%s5] sm:$0x1]
    %7 = vrot.lane.b32.xlu0 %v6, 120
    %v8 = vpop.permute.xlu0 %7
    %vm9 = vcmask 1048512
    %10 = vst.msk [vmem:[#allocation0] sm:$0x1] %vm9, %v8
    %s11 = scalar_lea.vmem %s0, 14
    %v12 = vld [vmem:[%s11] sm:$0x1]
    %13 = vrot.lane.b32.xlu0 %v12, 112
    %v14 = vpop.permute.xlu0 %13
    %vm15 = vcmask 982912
    %16 = vst.msk [vmem:[#allocation0] sm:$0x1] %vm15, %v14
    %s17 = scalar_lea.vmem %s0, 13
    %v18 = vld [vmem:[%s17] sm:$0x1]
    %19 = vrot.lane.b32.xlu0 %v18, 104
    %v20 = vpop.permute.xlu0 %19
    %vm21 = vcmask 917312
    %22 = vst.msk [vmem:[#allocation0] sm:$0x1] %vm21, %v20
    %s23 = scalar_lea.vmem %s0, 12
    %v24 = vld [vmem:[%s23] sm:$0x1]
    %25 = vrot.lane.b32.xlu0 %v24, 96
    %v26 = vpop.permute.xlu0 %25
    %vm27 = vcmask 851712
    %28 = vst.msk [vmem:[#allocation0] sm:$0x1] %vm27, %v26
    %s29 = scalar_lea.vmem %s0, 11
    %v30 = vld [vmem:[%s29] sm:$0x1]
    %31 = vrot.lane.b32.xlu0 %v30, 88
    %v32 = vpop.permute.xlu0 %31
    %vm33 = vcmask 786112
    %34 = vst.msk [vmem:[#allocation0] sm:$0x1] %vm33, %v32
    %s35 = scalar_lea.vmem %s0, 10
    %v36 = vld [vmem:[%s35] sm:$0x1]
    %37 = vrot.lane.b32.xlu0 %v36, 80
    %v38 = vpop.permute.xlu0 %37
    %vm39 = vcmask 720512
    %40 = vst.msk [vmem:[#allocation0] sm:$0x1] %vm39, %v38
    %s41 = scalar_lea.vmem %s0, 9
    %v42 = vld [vmem:[%s41] sm:$0x1]
    %43 = vrot.lane.b32.xlu0 %v42, 72
    %v44 = vpop.permute.xlu0 %43
    %vm45 = vcmask 654912
    %46 = vst.msk [vmem:[#allocation0] sm:$0x1] %vm45, %v44
    %s47 = scalar_lea.vmem %s0, 8
    %v48 = vld [vmem:[%s47] sm:$0x1]
    %49 = vrot.lane.b32.xlu0 %v48, 64
    %v50 = vpop.permute.xlu0 %49
    %vm51 = vcmask 589312
    %52 = vst.msk [vmem:[#allocation0] sm:$0x1] %vm51, %v50
    %s53 = scalar_lea.vmem %s0, 7
    %v54 = vld [vmem:[%s53] sm:$0x1]
    %55 = vrot.lane.b32.xlu0 %v54, 56
    %v56 = vpop.permute.xlu0 %55
    %vm57 = vcmask 523712
    %58 = vst.msk [vmem:[#allocation0] sm:$0x1] %vm57, %v56
    %s59 = scalar_lea.vmem %s0, 6
    %v60 = vld [vmem:[%s59] sm:$0x1]
    %61 = vrot.lane.b32.xlu0 %v60, 48
    %v62 = vpop.permute.xlu0 %61
    %vm63 = vcmask 458112
    %64 = vst.msk [vmem:[#allocation0] sm:$0x1] %vm63, %v62
    %s65 = scalar_lea.vmem %s0, 5
    %v66 = vld [vmem:[%s65] sm:$0x1]
    %67 = vrot.lane.b32.xlu0 %v66, 40
    %v68 = vpop.permute.xlu0 %67
    %vm69 = vcmask 392512
    %70 = vst.msk [vmem:[#allocation0] sm:$0x1] %vm69, %v68
    %s71 = scalar_lea.vmem %s0, 4
    %v72 = vld [vmem:[%s71] sm:$0x1]
    %73 = vrot.lane.b32.xlu0 %v72, 32
    %v74 = vpop.permute.xlu0 %73
    %vm75 = vcmask 326912
    %76 = vst.msk [vmem:[#allocation0] sm:$0x1] %vm75, %v74
    %s77 = scalar_lea.vmem %s0, 3
    %v78 = vld [vmem:[%s77] sm:$0x1]
    %79 = vrot.lane.b32.xlu0 %v78, 24
    %v80 = vpop.permute.xlu0 %79
    %vm81 = vcmask 261312
    %82 = vst.msk [vmem:[#allocation0] sm:$0x1] %vm81, %v80
    %s83 = scalar_lea.vmem %s0, 2
    %v84 = vld [vmem:[%s83] sm:$0x1]
    %85 = vrot.lane.b32.xlu0 %v84, 16
    %v86 = vpop.permute.xlu0 %85
    %vm87 = vcmask 195712
    %88 = vst.msk [vmem:[#allocation0] sm:$0x1] %vm87, %v86
    %s89 = scalar_lea.vmem %s0, 1
    %v90 = vld [vmem:[%s89] sm:$0x1]
    %91 = vrot.lane.b32.xlu0 %v90, 8
    %v92 = vpop.permute.xlu0 %91
    %vm93 = vcmask 130112
    %94 = vst.msk [vmem:[#allocation0] sm:$0x1] %vm93, %v92
    %s96 = ssub.s32 2, 1
    %v97 = vld [vmem:[#allocation0] sm:%s96]
    %s99 = ssub.s32 2, 1
    %100 = vst [vmem:[%s1] sm:%s99] %v97

// kernel: vgg_block.3
$region0: #{vgg_block.3}
  #allocation0 [shape = 'u32[]', space=smem, size = 0x4, offset = 0x4, fixed_abs, tag = 'smem constant byte address 0x4 - core index']
  #allocation1 [shape = 'u32[72,128]{1,0:T(1,128)}', space=vmem, size = 0x9000, scoped, tag = 'internal scratch']
  %s0 = inlined_call_operand.vmem [shape: f32[2,16,128], index: 0, kind: input, shape index: {}]
  %s1 = inlined_call_operand.vmem [shape: f32[1,128], index: 1, kind: input, shape index: {}]
  %s2 = inlined_call_operand.vmem [shape: f32[1,128], index: 2, kind: input, shape index: {}]
  %s3 = inlined_call_operand.vmem [shape: f32[2,16,128], index: 3, kind: output, shape index: {}]
  %s4 = sld [smem:[#allocation0]]
  $region45: #{vgg_block.3} parent=0
    _
  %s6 = ssub.s32 1, %s4
  %s7 = scalar_select 0, %s6, %s4
  loop: start=0, step=1, limit=6
  $region2: #{vgg_block.3} parent=0 // loop_pre_header
    _
  $region3: #{vgg_block.3} parent=0 // loop_header
    %s9 = sphi 0, %s13
    %p10 = scmp.ge.s32.totalorder %s9, 6
    %s16 = sphi 0, %s28
    %s17 = sphi 0, %s24
    %s18 = sphi 0, %s16
    %s19 = sphi 0, %s17
    %s20 = sphi 0, %s18
    %s21 = sphi 0, %s19
    %s33 = sphi 0, %s35
    %s36 = sphi 0, %s33
    %s37 = sphi 0, %s36
    %s53 = sphi 0, %s37
    %s57 = sphi 0, %s57
    %s59 = sphi 0, %s57
    %s60 = sphi 0, %s59
    %s74 = sphi 0, %s60
    %s78 = sphi 0, %s78
    %s80 = sphi 0, %s78
    %s81 = sphi 0, %s80
    %s95 = sphi 0, %s81
    %s103 = sphi 0, %s105
    %s106 = sphi 0, %s103
    %s107 = sphi 0, %s106
    %s123 = sphi 0, %s107
  $region4: #{vgg_block.3} parent=0 // loop_header_branch
    %12 = sbr.rel (%p10) target = $region8
  $region5: #{vgg_block.3} parent=0 // loop_body
    %s14 = ssub.s32 %s9, 1
    %s15 = ssub.s32 %s9, 2
    %s22 = sadd.s32 1, %s17
    %p23 = scmp.ge.s32.totalorder %s22, 2
    %s24 = scalar_select %p23, 0, %s22
    %s25 = sadd.s32 1, %s16
    %s26 = scalar_select %p23, %s25, %s16
    %p27 = scmp.ge.s32.totalorder %s26, 2
    %s28 = scalar_select %p27, 0, %s26
    %s29 = ssub.s32 %s16, %s28
    %s30 = ssub.s32 %s17, %s24
    %s31 = sor.u32 %s29, %s30
    %p32 = scmp.eq.s32.totalorder %s31, 0
    %s34 = sadd.s32 %s33, 1
    %s35 = scalar_select %p32, %s33, %s34
    %p38 = pneg %p32
    %p39 = scmp.eq.s32.totalorder %s9, 3
    %p40 = por %p38, %p39
    %p41 = scmp.ne.s32.totalorder %s33, %s36
    %p42 = scmp.eq.s32.totalorder %s9, 0
    %p43 = por %p41, %p42
    %p44 = scmp.ne.s32.totalorder %s33, %s36
    %p45 = scmp.eq.s32.totalorder %s14, 3
    %p46 = por %p44, %p45
    %p47 = scmp.ne.s32.totalorder %s36, %s37
    %p48 = scmp.eq.s32.totalorder %s14, 0
    %p49 = por %p47, %p48
    %p50 = scmp.ne.s32.totalorder %s36, %s37
    %p51 = scmp.eq.s32.totalorder %s15, 3
    %p52 = por %p50, %p51
    %p54 = scmp.ne.s32.totalorder %s37, %s53
    %p55 = scmp.eq.s32.totalorder %s15, 0
    %p56 = por %p54, %p55
    %s58 = sadd.s32 %s57, 1
    %p61 = scmp.eq.s32.totalorder %s9, 3
    %p62 = scmp.ne.s32.totalorder %s57, %s59
    %p63 = scmp.eq.s32.totalorder %s9, 0
    %p64 = por %p62, %p63
    %p65 = scmp.ne.s32.totalorder %s57, %s59
    %p66 = scmp.eq.s32.totalorder %s14, 3
    %p67 = por %p65, %p66
    %p68 = scmp.ne.s32.totalorder %s59, %s60
    %p69 = scmp.eq.s32.totalorder %s14, 0
    %p70 = por %p68, %p69
    %p71 = scmp.ne.s32.totalorder %s59, %s60
    %p72 = scmp.eq.s32.totalorder %s15, 3
    %p73 = por %p71, %p72
    %p75 = scmp.ne.s32.totalorder %s60, %s74
    %p76 = scmp.eq.s32.totalorder %s15, 0
    %p77 = por %p75, %p76
    %s79 = sadd.s32 %s78, 1
    %p82 = scmp.eq.s32.totalorder %s9, 3
    %p83 = scmp.ne.s32.totalorder %s78, %s80
    %p84 = scmp.eq.s32.totalorder %s9, 0
    %p85 = por %p83, %p84
    %p86 = scmp.ne.s32.totalorder %s78, %s80
    %p87 = scmp.eq.s32.totalorder %s14, 3
    %p88 = por %p86, %p87
    %p89 = scmp.ne.s32.totalorder %s80, %s81
    %p90 = scmp.eq.s32.totalorder %s14, 0
    %p91 = por %p89, %p90
    %p92 = scmp.ne.s32.totalorder %s80, %s81
    %p93 = scmp.eq.s32.totalorder %s15, 3
    %p94 = por %p92, %p93
    %p96 = scmp.ne.s32.totalorder %s81, %s95
    %p97 = scmp.eq.s32.totalorder %s15, 0
    %p98 = por %p96, %p97
    %s99 = ssub.s32 %s16, %s28
    %s100 = ssub.s32 %s17, %s24
    %s101 = sor.u32 %s99, %s100
    %p102 = scmp.eq.s32.totalorder %s101, 0
    %s104 = sadd.s32 %s103, 1
    %s105 = scalar_select %p102, %s103, %s104
    %p108 = pneg %p102
    %p109 = scmp.eq.s32.totalorder %s9, 3
    %p110 = por %p108, %p109
    %p111 = scmp.ne.s32.totalorder %s103, %s106
    %p112 = scmp.eq.s32.totalorder %s9, 0
    %p113 = por %p111, %p112
    %p114 = scmp.ne.s32.totalorder %s103, %s106
    %p115 = scmp.eq.s32.totalorder %s14, 3
    %p116 = por %p114, %p115
    %p117 = scmp.ne.s32.totalorder %s106, %s107
    %p118 = scmp.eq.s32.totalorder %s14, 0
    %p119 = por %p117, %p118
    %p120 = scmp.ne.s32.totalorder %s106, %s107
    %p121 = scmp.eq.s32.totalorder %s15, 3
    %p122 = por %p120, %p121
    %p124 = scmp.ne.s32.totalorder %s107, %s123
    %p125 = scmp.eq.s32.totalorder %s15, 0
    %p126 = por %p124, %p125
    %p127 = scmp.le.s32.totalorder 1, %s9
    %p128 = scmp.lt.s32.totalorder %s9, 5
    %p129 = pnand %p127, %p128
    %p130 = pneg %p129
    // Predicated region
    $region9: #{vgg_block.3} parent=5 // pred_check
      _
    $region10: #{vgg_block.3} parent=5 // pred_check_branch
      %132 = sbr.rel (%p129) target = $region12
    $region11: #{vgg_block.3} parent=5 // pred_region
      %s133 = ssub.s32 %s9, 1
      // Predicated region
      $region13: #{vgg_block.3} parent=11 // pred_check
        %p134 = pneg %p70
      $region14: #{vgg_block.3} parent=11 // pred_check_branch
        %136 = sbr.rel (%p134) target = $region16
      $region15: #{vgg_block.3} parent=11 // pred_region
        _
      $region16: #{vgg_block.3} parent=11 // pred_fallthru
        _
      // Predicated region
      $region17: #{vgg_block.3} parent=11 // pred_check
        %p137 = pneg %p91
      $region18: #{vgg_block.3} parent=11 // pred_check_branch
        %139 = sbr.rel (%p137) target = $region20
      $region19: #{vgg_block.3} parent=11 // pred_region
        _
      $region20: #{vgg_block.3} parent=11 // pred_fallthru
        _
    $region12: #{vgg_block.3} parent=5 // pred_fallthru
      _
    %p140 = scmp.lt.s32.totalorder %s9, 4
    // Predicated region
    $region21: #{vgg_block.3} parent=5 // pred_check
      %p141 = pneg %p140
    $region22: #{vgg_block.3} parent=5 // pred_check_branch
      %143 = sbr.rel (%p141) target = $region24
    $region23: #{vgg_block.3} parent=5 // pred_region
      // Predicated region
      $region25: #{vgg_block.3} parent=23 // pred_check
        %p144 = pneg %p43
      $region26: #{vgg_block.3} parent=23 // pred_check_branch
        %146 = sbr.rel (%p144) target = $region28
      $region27: #{vgg_block.3} parent=23 // pred_region
        %p147 = scmp.lt.s32.totalorder %s16, 1
        %s148 = scalar_select %p147, %s16, 1
        %p149 = scmp.lt.s32.totalorder %s17, 1
        %s150 = scalar_select %p149, %s17, 1
        %s151 = smul.addr %s148, 2
        %s152 = sadd.s32 %s150, %s151
        %s153 = smul.addr %s152, 8
        %s154 = scalar_lea.vmem %s0, %s153
      $region28: #{vgg_block.3} parent=23 // pred_fallthru
        _
    $region24: #{vgg_block.3} parent=5 // pred_fallthru
      _
    %p155 = scmp.le.s32.totalorder 1, %s9
    %p156 = scmp.lt.s32.totalorder %s9, 5
    %p157 = pnand %p155, %p156
    %p158 = pneg %p157
    // Predicated region
    $region29: #{vgg_block.3} parent=5 // pred_check
      _
    $region30: #{vgg_block.3} parent=5 // pred_check_branch
      %160 = sbr.rel (%p157) target = $region32
    $region31: #{vgg_block.3} parent=5 // pred_region
      %s161 = ssub.s32 %s9, 1
      %p162 = scmp.lt.s32.totalorder %s18, 1
      %s163 = scalar_select %p162, %s18, 1
      %p164 = scmp.lt.s32.totalorder %s19, 1
      %s165 = scalar_select %p164, %s19, 1
      %s166 = smul.addr %s163, 2
      %s167 = sadd.s32 %s165, %s166
      %s168 = smul.addr %s167, 8
      %s169 = scalar_lea.vmem %s0, %s168
      %p170 = pneg %p49
      %p171 = pneg %p46
      %p172 = pneg %p70
      %p173 = pneg %p67
      %p174 = pneg %p91
      %p175 = pneg %p88
      %p176 = pneg %p119
      %p177 = pneg %p116
      %p178 = scmp.lt.s32.totalorder %s18, 1
      %s179 = scalar_select %p178, %s18, 1
      %p180 = scmp.lt.s32.totalorder %s19, 1
      %s181 = scalar_select %p180, %s19, 1
      %s182 = smul.addr %s179, 2
      %s183 = sadd.s32 %s181, %s182
      %s184 = smul.addr %s183, 8
      %s185 = scalar_lea.vmem %s3, %s184
      %p186 = scmp.lt.s32.totalorder %s18, 1
      %s187 = scalar_select %p186, %s18, 1
      %p188 = scmp.lt.s32.totalorder %s19, 1
      %s189 = scalar_select %p188, %s19, 1
      %s190 = smul.addr %s187, 2
      %s191 = sadd.s32 %s189, %s190
      %s192 = smul.addr %s191, 8
      %s193 = scalar_lea.vmem %s0, %s192
      %p194 = scmp.lt.s32.totalorder %s18, 1
      %s195 = scalar_select %p194, %s18, 1
      %p196 = scmp.lt.s32.totalorder %s19, 1
      %s197 = scalar_select %p196, %s19, 1
      %s198 = smul.addr %s195, 2
      %s199 = sadd.s32 %s197, %s198
      %s200 = smul.addr %s199, 8
      %s201 = scalar_lea.vmem %s3, %s200
      %v202 = vld [vmem:[%s193] sm:$0xff]
      %v203 = vld [vmem:[%s1] sm:$0x1]
      %v205 = vperm.slane %v203, 0
      %v207 = vmul.f32 %v202, %v205
      %v208 = vld [vmem:[%s2] sm:$0x1]
      %v210 = vperm.slane %v208, 0
      %v212 = vadd.f32 %v207, %v210
      %v213 = vmax.f32 %v212, 0.0
      %214 = vst [vmem:[%s201] sm:$0xff] %v213
      %p215 = scmp.lt.s32.totalorder %s18, 1
      %s216 = scalar_select %p215, %s18, 1
      %p217 = scmp.lt.s32.totalorder %s19, 1
      %s218 = scalar_select %p217, %s19, 1
      %s219 = smul.addr %s216, 2
      %s220 = sadd.s32 %s218, %s219
      %s221 = smul.addr %s220, 8
      %s222 = scalar_lea.vmem %s3, %s221
      // Predicated region
      $region33: #{vgg_block.3} parent=31 // pred_check
        %p223 = pneg %p116
      $region34: #{vgg_block.3} parent=31 // pred_check_branch
        %225 = sbr.rel (%p223) target = $region36
      $region35: #{vgg_block.3} parent=31 // pred_region
        _
      $region36: #{vgg_block.3} parent=31 // pred_fallthru
        _
    $region32: #{vgg_block.3} parent=5 // pred_fallthru
      _
    %p226 = scmp.le.s32.totalorder 2, %s9
    // Predicated region
    $region37: #{vgg_block.3} parent=5 // pred_check
      %p227 = pneg %p226
    $region38: #{vgg_block.3} parent=5 // pred_check_branch
      %229 = sbr.rel (%p227) target = $region40
    $region39: #{vgg_block.3} parent=5 // pred_region
      %s230 = ssub.s32 %s9, 2
      // Predicated region
      $region41: #{vgg_block.3} parent=39 // pred_check
        %p231 = pneg %p122
      $region42: #{vgg_block.3} parent=39 // pred_check_branch
        %233 = sbr.rel (%p231) target = $region44
      $region43: #{vgg_block.3} parent=39 // pred_region
        %p234 = scmp.lt.s32.totalorder %s20, 1
        %s235 = scalar_select %p234, %s20, 1
        %p236 = scmp.lt.s32.totalorder %s21, 1
        %s237 = scalar_select %p236, %s21, 1
        %s238 = smul.addr %s235, 2
        %s239 = sadd.s32 %s237, %s238
        %s240 = smul.addr %s239, 8
        %s241 = scalar_lea.vmem %s3, %s240
      $region44: #{vgg_block.3} parent=39 // pred_fallthru
        _
    $region40: #{vgg_block.3} parent=5 // pred_fallthru
      _
  $region6: #{vgg_block.3} parent=0 // loop_footer
    %s13 = sadd.s32 1, %s9
  $region7: #{vgg_block.3} parent=0 // loop_footer_branch
    %8 = sbr.rel target = $region3
  $region8: #{vgg_block.3} parent=0 // loop_exit
    _

// kernel: vgg_block.2
$region0: #{vgg_block.2}
  #allocation0 [shape = 'u32[]', space=smem, size = 0x4, offset = 0x4, fixed_abs, tag = 'smem constant byte address 0x4 - core index']
  #allocation1 [shape = 'u32[72,128]{1,0:T(1,128)}', space=vmem, size = 0x9000, scoped, tag = 'internal scratch']
  %s0 = inlined_call_operand.vmem [shape: f32[2,18,72], index: 0, kind: input, shape index: {}]
  %s1 = inlined_call_operand.vmem [shape: f32[3,72,128], index: 1, kind: input, shape index: {}]
  %s2 = inlined_call_operand.vmem [shape: f32[1,128], index: 2, kind: input, shape index: {}]
  %s3 = inlined_call_operand.vmem [shape: f32[2,16,128], index: 3, kind: output, shape index: {0}]
  %s4 = inlined_call_operand.vmem [shape: f32[2,2,1,128], index: 4, kind: output, shape index: {1}]
  %s5 = inlined_call_operand.vmem [shape: f32[2,2,1,128], index: 5, kind: output, shape index: {2}]
  %6 = xla_tuple %s3, %s4, %s5
  %s7 = sld [smem:[#allocation0]]
  $region61: #{vgg_block.2} parent=0
    _
  %s9 = ssub.s32 1, %s7
  %s10 = scalar_select 0, %s9, %s7
  loop: start=0, step=1, limit=6
  $region2: #{vgg_block.2} parent=0 // loop_pre_header
    _
  $region3: #{vgg_block.2} parent=0 // loop_header
    %s12 = sphi 0, %s16
    %p13 = scmp.ge.s32.totalorder %s12, 6
    %s19 = sphi 0, %s31
    %s20 = sphi 0, %s27
    %s21 = sphi 0, %s19
    %s22 = sphi 0, %s20
    %s23 = sphi 0, %s21
    %s24 = sphi 0, %s22
    %s34 = sphi 0, %s36
    %s37 = sphi 0, %s34
    %s38 = sphi 0, %s37
    %s54 = sphi 0, %s38
    %s58 = sphi 0, %s58
    %s60 = sphi 0, %s58
    %s61 = sphi 0, %s60
    %s75 = sphi 0, %s61
    %s79 = sphi 0, %s79
    %s81 = sphi 0, %s79
    %s82 = sphi 0, %s81
    %s96 = sphi 0, %s82
    %s104 = sphi 0, %s106
    %s107 = sphi 0, %s104
    %s108 = sphi 0, %s107
    %s124 = sphi 0, %s108
    %s132 = sphi 0, %s134
    %s135 = sphi 0, %s132
    %s136 = sphi 0, %s135
    %s152 = sphi 0, %s136
    %s160 = sphi 0, %s162
    %s163 = sphi 0, %s160
    %s164 = sphi 0, %s163
    %s180 = sphi 0, %s164
  $region4: #{vgg_block.2} parent=0 // loop_header_branch
    %15 = sbr.rel (%p13) target = $region8
  $region5: #{vgg_block.2} parent=0 // loop_body
    %s17 = ssub.s32 %s12, 1
    %s18 = ssub.s32 %s12, 2
    %s25 = sadd.s32 1, %s20
    %p26 = scmp.ge.s32.totalorder %s25, 2
    %s27 = scalar_select %p26, 0, %s25
    %s28 = sadd.s32 1, %s19
    %s29 = scalar_select %p26, %s28, %s19
    %p30 = scmp.ge.s32.totalorder %s29, 2
    %s31 = scalar_select %p30, 0, %s29
    %s32 = ssub.s32 %s19, %s31
    %p33 = scmp.eq.s32.totalorder %s32, 0
    %s35 = sadd.s32 %s34, 1
    %s36 = scalar_select %p33, %s34, %s35
    %p39 = pneg %p33
    %p40 = scmp.eq.s32.totalorder %s12, 3
    %p41 = por %p39, %p40
    %p42 = scmp.ne.s32.totalorder %s34, %s37
    %p43 = scmp.eq.s32.totalorder %s12, 0
    %p44 = por %p42, %p43
    %p45 = scmp.ne.s32.totalorder %s34, %s37
    %p46 = scmp.eq.s32.totalorder %s17, 3
    %p47 = por %p45, %p46
    %p48 = scmp.ne.s32.totalorder %s37, %s38
    %p49 = scmp.eq.s32.totalorder %s17, 0
    %p50 = por %p48, %p49
    %p51 = scmp.ne.s32.totalorder %s37, %s38
    %p52 = scmp.eq.s32.totalorder %s18, 3
    %p53 = por %p51, %p52
    %p55 = scmp.ne.s32.totalorder %s38, %s54
    %p56 = scmp.eq.s32.totalorder %s18, 0
    %p57 = por %p55, %p56
    %s59 = sadd.s32 %s58, 1
    %p62 = scmp.eq.s32.totalorder %s12, 3
    %p63 = scmp.ne.s32.totalorder %s58, %s60
    %p64 = scmp.eq.s32.totalorder %s12, 0
    %p65 = por %p63, %p64
    %p66 = scmp.ne.s32.totalorder %s58, %s60
    %p67 = scmp.eq.s32.totalorder %s17, 3
    %p68 = por %p66, %p67
    %p69 = scmp.ne.s32.totalorder %s60, %s61
    %p70 = scmp.eq.s32.totalorder %s17, 0
    %p71 = por %p69, %p70
    %p72 = scmp.ne.s32.totalorder %s60, %s61
    %p73 = scmp.eq.s32.totalorder %s18, 3
    %p74 = por %p72, %p73
    %p76 = scmp.ne.s32.totalorder %s61, %s75
    %p77 = scmp.eq.s32.totalorder %s18, 0
    %p78 = por %p76, %p77
    %s80 = sadd.s32 %s79, 1
    %p83 = scmp.eq.s32.totalorder %s12, 3
    %p84 = scmp.ne.s32.totalorder %s79, %s81
    %p85 = scmp.eq.s32.totalorder %s12, 0
    %p86 = por %p84, %p85
    %p87 = scmp.ne.s32.totalorder %s79, %s81
    %p88 = scmp.eq.s32.totalorder %s17, 3
    %p89 = por %p87, %p88
    %p90 = scmp.ne.s32.totalorder %s81, %s82
    %p91 = scmp.eq.s32.totalorder %s17, 0
    %p92 = por %p90, %p91
    %p93 = scmp.ne.s32.totalorder %s81, %s82
    %p94 = scmp.eq.s32.totalorder %s18, 3
    %p95 = por %p93, %p94
    %p97 = scmp.ne.s32.totalorder %s82, %s96
    %p98 = scmp.eq.s32.totalorder %s18, 0
    %p99 = por %p97, %p98
    %s100 = ssub.s32 %s19, %s31
    %s101 = ssub.s32 %s20, %s27
    %s102 = sor.u32 %s100, %s101
    %p103 = scmp.eq.s32.totalorder %s102, 0
    %s105 = sadd.s32 %s104, 1
    %s106 = scalar_select %p103, %s104, %s105
    %p109 = pneg %p103
    %p110 = scmp.eq.s32.totalorder %s12, 3
    %p111 = por %p109, %p110
    %p112 = scmp.ne.s32.totalorder %s104, %s107
    %p113 = scmp.eq.s32.totalorder %s12, 0
    %p114 = por %p112, %p113
    %p115 = scmp.ne.s32.totalorder %s104, %s107
    %p116 = scmp.eq.s32.totalorder %s17, 3
    %p117 = por %p115, %p116
    %p118 = scmp.ne.s32.totalorder %s107, %s108
    %p119 = scmp.eq.s32.totalorder %s17, 0
    %p120 = por %p118, %p119
    %p121 = scmp.ne.s32.totalorder %s107, %s108
    %p122 = scmp.eq.s32.totalorder %s18, 3
    %p123 = por %p121, %p122
    %p125 = scmp.ne.s32.totalorder %s108, %s124
    %p126 = scmp.eq.s32.totalorder %s18, 0
    %p127 = por %p125, %p126
    %s128 = ssub.s32 %s19, %s31
    %s129 = ssub.s32 %s20, %s27
    %s130 = sor.u32 %s128, %s129
    %p131 = scmp.eq.s32.totalorder %s130, 0
    %s133 = sadd.s32 %s132, 1
    %s134 = scalar_select %p131, %s132, %s133
    %p137 = pneg %p131
    %p138 = scmp.eq.s32.totalorder %s12, 3
    %p139 = por %p137, %p138
    %p140 = scmp.ne.s32.totalorder %s132, %s135
    %p141 = scmp.eq.s32.totalorder %s12, 0
    %p142 = por %p140, %p141
    %p143 = scmp.ne.s32.totalorder %s132, %s135
    %p144 = scmp.eq.s32.totalorder %s17, 3
    %p145 = por %p143, %p144
    %p146 = scmp.ne.s32.totalorder %s135, %s136
    %p147 = scmp.eq.s32.totalorder %s17, 0
    %p148 = por %p146, %p147
    %p149 = scmp.ne.s32.totalorder %s135, %s136
    %p150 = scmp.eq.s32.totalorder %s18, 3
    %p151 = por %p149, %p150
    %p153 = scmp.ne.s32.totalorder %s136, %s152
    %p154 = scmp.eq.s32.totalorder %s18, 0
    %p155 = por %p153, %p154
    %s156 = ssub.s32 %s19, %s31
    %s157 = ssub.s32 %s20, %s27
    %s158 = sor.u32 %s156, %s157
    %p159 = scmp.eq.s32.totalorder %s158, 0
    %s161 = sadd.s32 %s160, 1
    %s162 = scalar_select %p159, %s160, %s161
    %p165 = pneg %p159
    %p166 = scmp.eq.s32.totalorder %s12, 3
    %p167 = por %p165, %p166
    %p168 = scmp.ne.s32.totalorder %s160, %s163
    %p169 = scmp.eq.s32.totalorder %s12, 0
    %p170 = por %p168, %p169
    %p171 = scmp.ne.s32.totalorder %s160, %s163
    %p172 = scmp.eq.s32.totalorder %s17, 3
    %p173 = por %p171, %p172
    %p174 = scmp.ne.s32.totalorder %s163, %s164
    %p175 = scmp.eq.s32.totalorder %s17, 0
    %p176 = por %p174, %p175
    %p177 = scmp.ne.s32.totalorder %s163, %s164
    %p178 = scmp.eq.s32.totalorder %s18, 3
    %p179 = por %p177, %p178
    %p181 = scmp.ne.s32.totalorder %s164, %s180
    %p182 = scmp.eq.s32.totalorder %s18, 0
    %p183 = por %p181, %p182
    %p184 = scmp.le.s32.totalorder 1, %s12
    %p185 = scmp.lt.s32.totalorder %s12, 5
    %p186 = pnand %p184, %p185
    %p187 = pneg %p186
    // Predicated region
    $region9: #{vgg_block.2} parent=5 // pred_check
      _
    $region10: #{vgg_block.2} parent=5 // pred_check_branch
      %189 = sbr.rel (%p186) target = $region12
    $region11: #{vgg_block.2} parent=5 // pred_region
      %s190 = ssub.s32 %s12, 1
      // Predicated region
      $region13: #{vgg_block.2} parent=11 // pred_check
        %p191 = pneg %p71
      $region14: #{vgg_block.2} parent=11 // pred_check_branch
        %193 = sbr.rel (%p191) target = $region16
      $region15: #{vgg_block.2} parent=11 // pred_region
        _
      $region16: #{vgg_block.2} parent=11 // pred_fallthru
        _
      // Predicated region
      $region17: #{vgg_block.2} parent=11 // pred_check
        %p194 = pneg %p92
      $region18: #{vgg_block.2} parent=11 // pred_check_branch
        %196 = sbr.rel (%p194) target = $region20
      $region19: #{vgg_block.2} parent=11 // pred_region
        _
      $region20: #{vgg_block.2} parent=11 // pred_fallthru
        _
    $region12: #{vgg_block.2} parent=5 // pred_fallthru
      _
    %p197 = scmp.lt.s32.totalorder %s12, 4
    // Predicated region
    $region21: #{vgg_block.2} parent=5 // pred_check
      %p198 = pneg %p197
    $region22: #{vgg_block.2} parent=5 // pred_check_branch
      %200 = sbr.rel (%p198) target = $region24
    $region23: #{vgg_block.2} parent=5 // pred_region
      // Predicated region
      $region25: #{vgg_block.2} parent=23 // pred_check
        %p201 = pneg %p44
      $region26: #{vgg_block.2} parent=23 // pred_check_branch
        %203 = sbr.rel (%p201) target = $region28
      $region27: #{vgg_block.2} parent=23 // pred_region
        %p204 = scmp.lt.s32.totalorder %s19, 1
        %s205 = scalar_select %p204, %s19, 1
        %s206 = smul.addr %s205, 3
        %s207 = smul.addr %s206, 8
        %s208 = scalar_lea.vmem %s0, %s207
      $region28: #{vgg_block.2} parent=23 // pred_fallthru
        _
    $region24: #{vgg_block.2} parent=5 // pred_fallthru
      _
    %p209 = scmp.le.s32.totalorder 1, %s12
    %p210 = scmp.lt.s32.totalorder %s12, 5
    %p211 = pnand %p209, %p210
    %p212 = pneg %p211
    // Predicated region
    $region29: #{vgg_block.2} parent=5 // pred_check
      _
    $region30: #{vgg_block.2} parent=5 // pred_check_branch
      %214 = sbr.rel (%p211) target = $region32
    $region31: #{vgg_block.2} parent=5 // pred_region
      %s215 = ssub.s32 %s12, 1
      %p216 = scmp.lt.s32.totalorder %s21, 1
      %s217 = scalar_select %p216, %s21, 1
      %s218 = smul.addr %s217, 3
      %s219 = smul.addr %s218, 8
      %s220 = scalar_lea.vmem %s0, %s219
      %p221 = pneg %p50
      %p222 = pneg %p47
      %p223 = pneg %p71
      %p224 = pneg %p68
      %p225 = pneg %p92
      %p226 = pneg %p89
      %p227 = pneg %p120
      %p228 = pneg %p117
      %p229 = scmp.lt.s32.totalorder %s21, 1
      %s230 = scalar_select %p229, %s21, 1
      %p231 = scmp.lt.s32.totalorder %s22, 1
      %s232 = scalar_select %p231, %s22, 1
      %s233 = smul.addr %s230, 2
      %s234 = sadd.s32 %s232, %s233
      %s235 = smul.addr %s234, 8
      %s236 = scalar_lea.vmem %s3, %s235
      %p237 = pneg %p148
      %p238 = pneg %p145
      %p239 = scmp.lt.s32.totalorder %s21, 1
      %s240 = scalar_select %p239, %s21, 1
      %p241 = scmp.lt.s32.totalorder %s22, 1
      %s242 = scalar_select %p241, %s22, 1
      %s243 = smul.addr %s240, 2
      %s244 = sadd.s32 %s242, %s243
      %s245 = scalar_lea.vmem %s4, %s244
      %p246 = pneg %p176
      %p247 = pneg %p173
      %p248 = scmp.lt.s32.totalorder %s21, 1
      %s249 = scalar_select %p248, %s21, 1
      %p250 = scmp.lt.s32.totalorder %s22, 1
      %s251 = scalar_select %p250, %s22, 1
      %s252 = smul.addr %s249, 2
      %s253 = sadd.s32 %s251, %s252
      %s254 = scalar_lea.vmem %s5, %s253
      %p255 = scmp.lt.s32.totalorder %s21, 1
      %s256 = scalar_select %p255, %s21, 1
      %s257 = smul.addr %s256, 3
      %s258 = smul.addr %s257, 8
      %s259 = scalar_lea.vmem %s0, %s258
      %p260 = scmp.lt.s32.totalorder %s21, 1
      %s261 = scalar_select %p260, %s21, 1
      %p262 = scmp.lt.s32.totalorder %s22, 1
      %s263 = scalar_select %p262, %s22, 1
      %s264 = smul.addr %s261, 2
      %s265 = sadd.s32 %s263, %s264
      %s266 = smul.addr %s265, 8
      %s267 = scalar_lea.vmem %s3, %s266
      %p268 = scmp.lt.s32.totalorder %s21, 1
      %s269 = scalar_select %p268, %s21, 1
      %p270 = scmp.lt.s32.totalorder %s22, 1
      %s271 = scalar_select %p270, %s22, 1
      %s272 = smul.addr %s269, 2
      %s273 = sadd.s32 %s271, %s272
      %s274 = scalar_lea.vmem %s4, %s273
      %p275 = scmp.lt.s32.totalorder %s21, 1
      %s276 = scalar_select %p275, %s21, 1
      %p277 = scmp.lt.s32.totalorder %s22, 1
      %s278 = scalar_select %p277, %s22, 1
      %s279 = smul.addr %s276, 2
      %s280 = sadd.s32 %s278, %s279
      %s281 = scalar_lea.vmem %s5, %s280
      %s282 = smul.u32 %s22, 8
      %s283 = scalar_lea.vmem %s259, %s282
      %v284 = vld [vmem:[%s283] sm:$0xff]
      %v285 = vld [vmem:[%s1] sm:$0xff]
      %v286 = vld [vmem:[%s1 + $0x8] sm:$0xff]
      %v287 = vld [vmem:[%s1 + $0x10] sm:$0xff]
      %v288 = vld [vmem:[%s1 + $0x18] sm:$0xff]
      %v289 = vld [vmem:[%s1 + $0x20] sm:$0xff]
      %v290 = vld [vmem:[%s1 + $0x28] sm:$0xff]
      %v291 = vld [vmem:[%s1 + $0x30] sm:$0xff]
      %v292 = vld [vmem:[%s1 + $0x38] sm:$0xff]
      %v293 = vld [vmem:[%s1 + $0x40] sm:$0xff]
      %s294 = sadd.s32 %s282, 1
      %s295 = scalar_lea.vmem %s259, %s294
      %v296 = vld [vmem:[%s295] sm:$0xff]
      %s297 = scalar_lea.vmem %s1, 72
      %v298 = vld [vmem:[%s297] sm:$0xff]
      %v299 = vld [vmem:[%s297 + $0x8] sm:$0xff]
      %v300 = vld [vmem:[%s297 + $0x10] sm:$0xff]
      %v301 = vld [vmem:[%s297 + $0x18] sm:$0xff]
      %v302 = vld [vmem:[%s297 + $0x20] sm:$0xff]
      %v303 = vld [vmem:[%s297 + $0x28] sm:$0xff]
      %v304 = vld [vmem:[%s297 + $0x30] sm:$0xff]
      %v305 = vld [vmem:[%s297 + $0x38] sm:$0xff]
      %v306 = vld [vmem:[%s297 + $0x40] sm:$0xff]
      %vm307 = vcmask 588800
      %v309 = vsel %vm307, %v296, 0
      %311 = vmatpush.msra.mxu0 0.0
      %312 = vmatpush.msra.mxu0 0.0
      %313 = vmatpush.msra.mxu0 0.0
      %314 = vmatpush.msra.mxu0 0.0
      %315 = vmatpush.msra.mxu0 0.0
      %316 = vmatpush.msra.mxu0 0.0
      %317 = vmatpush.msra.mxu0 0.0
      %318 = vmatpush.msra.mxu0 %v306
      %319 = vmatpush.msra.mxu0 %v305
      %320 = vmatpush.msra.mxu0 %v304
      %321 = vmatpush.msra.mxu0 %v303
      %322 = vmatpush.msra.mxu0 %v302
      %323 = vmatpush.msra.mxu0 %v301
      %324 = vmatpush.msra.mxu0 %v300
      %325 = vmatpush.msra.mxu0 %v299
      %326 = vmatpush.msra.mxu0 %v298
      %327 = vmatmul.f32.gmra.mxu0 %v309
      %v328 = vpop.f32.mrf.mxu0
      %v329 = vadd.f32 0.0, %v328
      %330 = vdwg.mxu0
      %v332 = vsel %vm307, %v284, 0
      %334 = vmatpush.msra.mxu0 0.0
      %335 = vmatpush.msra.mxu0 0.0
      %336 = vmatpush.msra.mxu0 0.0
      %337 = vmatpush.msra.mxu0 0.0
      %338 = vmatpush.msra.mxu0 0.0
      %339 = vmatpush.msra.mxu0 0.0
      %340 = vmatpush.msra.mxu0 0.0
      %341 = vmatpush.msra.mxu0 %v293
      %342 = vmatpush.msra.mxu0 %v292
      %343 = vmatpush.msra.mxu0 %v291
      %344 = vmatpush.msra.mxu0 %v290
      %345 = vmatpush.msra.mxu0 %v289
      %346 = vmatpush.msra.mxu0 %v288
      %347 = vmatpush.msra.mxu0 %v287
      %348 = vmatpush.msra.mxu0 %v286
      %349 = vmatpush.msra.mxu0 %v285
      %350 = vmatmul.f32.gmra.mxu0 %v332
      %v351 = vpop.f32.mrf.mxu0
      %v352 = vadd.f32 %v329, %v351
      %353 = vdwg.mxu0
      %s354 = sadd.s32 %s282, 2
      %s355 = scalar_lea.vmem %s259, %s354
      %v356 = vld [vmem:[%s355] sm:$0xff]
      %s357 = scalar_lea.vmem %s1, 144
      %v358 = vld [vmem:[%s357] sm:$0xff]
      %v359 = vld [vmem:[%s357 + $0x8] sm:$0xff]
      %v360 = vld [vmem:[%s357 + $0x10] sm:$0xff]
      %v361 = vld [vmem:[%s357 + $0x18] sm:$0xff]
      %v362 = vld [vmem:[%s357 + $0x20] sm:$0xff]
      %v363 = vld [vmem:[%s357 + $0x28] sm:$0xff]
      %v364 = vld [vmem:[%s357 + $0x30] sm:$0xff]
      %v365 = vld [vmem:[%s357 + $0x38] sm:$0xff]
      %v366 = vld [vmem:[%s357 + $0x40] sm:$0xff]
      %v368 = vsel %vm307, %v356, 0
      %370 = vmatpush.msra.mxu0 0.0
      %371 = vmatpush.msra.mxu0 0.0
      %372 = vmatpush.msra.mxu0 0.0
      %373 = vmatpush.msra.mxu0 0.0
      %374 = vmatpush.msra.mxu0 0.0
      %375 = vmatpush.msra.mxu0 0.0
      %376 = vmatpush.msra.mxu0 0.0
      %377 = vmatpush.msra.mxu0 %v366
      %378 = vmatpush.msra.mxu0 %v365
      %379 = vmatpush.msra.mxu0 %v364
      %380 = vmatpush.msra.mxu0 %v363
      %381 = vmatpush.msra.mxu0 %v362
      %382 = vmatpush.msra.mxu0 %v361
      %383 = vmatpush.msra.mxu0 %v360
      %384 = vmatpush.msra.mxu0 %v359
      %385 = vmatpush.msra.mxu0 %v358
      %386 = vmatmul.f32.gmra.mxu0 %v368
      %v387 = vpop.f32.mrf.mxu0
      %v388 = vadd.f32 0.0, %v387
      %389 = vdwg.mxu0
      %v390 = vadd.f32 %v352, %v388
      %v391 = vld [vmem:[%s2] sm:$0x1]
      %v393 = vperm.slane %v391, 0
      %v395 = vadd.f32 %v390, %v393
      %396 = vst [vmem:[%s267] sm:$0xff] %v395
      %v397 = vrot.slane %v395, 4
      %v398 = vadd.f32 %v395, %v397
      %v399 = vrot.slane %v398, 2
      %v400 = vadd.f32 %v398, %v399
      %v401 = vrot.slane %v400, 1
      %v402 = vadd.f32 %v400, %v401
      %403 = vst [vmem:[%s274] sm:$0x1] %v402
      %v404 = vmul.f32 %v395, %v395
      %v405 = vrot.slane %v404, 4
      %v406 = vadd.f32 %v404, %v405
      %v407 = vrot.slane %v406, 2
      %v408 = vadd.f32 %v406, %v407
      %v409 = vrot.slane %v408, 1
      %v410 = vadd.f32 %v408, %v409
      %411 = vst [vmem:[%s281] sm:$0x1] %v410
      %p412 = scmp.lt.s32.totalorder %s21, 1
      %s413 = scalar_select %p412, %s21, 1
      %p414 = scmp.lt.s32.totalorder %s22, 1
      %s415 = scalar_select %p414, %s22, 1
      %s416 = smul.addr %s413, 2
      %s417 = sadd.s32 %s415, %s416
      %s418 = smul.addr %s417, 8
      %s419 = scalar_lea.vmem %s3, %s418
      %p420 = scmp.lt.s32.totalorder %s21, 1
      %s421 = scalar_select %p420, %s21, 1
      %p422 = scmp.lt.s32.totalorder %s22, 1
      %s423 = scalar_select %p422, %s22, 1
      %s424 = smul.addr %s421, 2
      %s425 = sadd.s32 %s423, %s424
      %s426 = scalar_lea.vmem %s4, %s425
      %p427 = scmp.lt.s32.totalorder %s21, 1
      %s428 = scalar_select %p427, %s21, 1
      %p429 = scmp.lt.s32.totalorder %s22, 1
      %s430 = scalar_select %p429, %s22, 1
      %s431 = smul.addr %s428, 2
      %s432 = sadd.s32 %s430, %s431
      %s433 = scalar_lea.vmem %s5, %s432
      // Predicated region
      $region33: #{vgg_block.2} parent=31 // pred_check
        %p434 = pneg %p117
      $region34: #{vgg_block.2} parent=31 // pred_check_branch
        %436 = sbr.rel (%p434) target = $region36
      $region35: #{vgg_block.2} parent=31 // pred_region
        _
      $region36: #{vgg_block.2} parent=31 // pred_fallthru
        _
      // Predicated region
      $region37: #{vgg_block.2} parent=31 // pred_check
        %p437 = pneg %p145
      $region38: #{vgg_block.2} parent=31 // pred_check_branch
        %439 = sbr.rel (%p437) target = $region40
      $region39: #{vgg_block.2} parent=31 // pred_region
        _
      $region40: #{vgg_block.2} parent=31 // pred_fallthru
        _
      // Predicated region
      $region41: #{vgg_block.2} parent=31 // pred_check
        %p440 = pneg %p173
      $region42: #{vgg_block.2} parent=31 // pred_check_branch
        %442 = sbr.rel (%p440) target = $region44
      $region43: #{vgg_block.2} parent=31 // pred_region
        _
      $region44: #{vgg_block.2} parent=31 // pred_fallthru
        _
    $region32: #{vgg_block.2} parent=5 // pred_fallthru
      _
    %p443 = scmp.le.s32.totalorder 2, %s12
    // Predicated region
    $region45: #{vgg_block.2} parent=5 // pred_check
      %p444 = pneg %p443
    $region46: #{vgg_block.2} parent=5 // pred_check_branch
      %446 = sbr.rel (%p444) target = $region48
    $region47: #{vgg_block.2} parent=5 // pred_region
      %s447 = ssub.s32 %s12, 2
      // Predicated region
      $region49: #{vgg_block.2} parent=47 // pred_check
        %p448 = pneg %p123
      $region50: #{vgg_block.2} parent=47 // pred_check_branch
        %450 = sbr.rel (%p448) target = $region52
      $region51: #{vgg_block.2} parent=47 // pred_region
        %p451 = scmp.lt.s32.totalorder %s23, 1
        %s452 = scalar_select %p451, %s23, 1
        %p453 = scmp.lt.s32.totalorder %s24, 1
        %s454 = scalar_select %p453, %s24, 1
        %s455 = smul.addr %s452, 2
        %s456 = sadd.s32 %s454, %s455
        %s457 = smul.addr %s456, 8
        %s458 = scalar_lea.vmem %s3, %s457
      $region52: #{vgg_block.2} parent=47 // pred_fallthru
        _
      // Predicated region
      $region53: #{vgg_block.2} parent=47 // pred_check
        %p459 = pneg %p151
      $region54: #{vgg_block.2} parent=47 // pred_check_branch
        %461 = sbr.rel (%p459) target = $region56
      $region55: #{vgg_block.2} parent=47 // pred_region
        %p462 = scmp.lt.s32.totalorder %s23, 1
        %s463 = scalar_select %p462, %s23, 1
        %p464 = scmp.lt.s32.totalorder %s24, 1
        %s465 = scalar_select %p464, %s24, 1
        %s466 = smul.addr %s463, 2
        %s467 = sadd.s32 %s465, %s466
        %s468 = scalar_lea.vmem %s4, %s467
      $region56: #{vgg_block.2} parent=47 // pred_fallthru
        _
      // Predicated region
      $region57: #{vgg_block.2} parent=47 // pred_check
        %p469 = pneg %p179
      $region58: #{vgg_block.2} parent=47 // pred_check_branch
        %471 = sbr.rel (%p469) target = $region60
      $region59: #{vgg_block.2} parent=47 // pred_region
        %p472 = scmp.lt.s32.totalorder %s23, 1
        %s473 = scalar_select %p472, %s23, 1
        %p474 = scmp.lt.s32.totalorder %s24, 1
        %s475 = scalar_select %p474, %s24, 1
        %s476 = smul.addr %s473, 2
        %s477 = sadd.s32 %s475, %s476
        %s478 = scalar_lea.vmem %s5, %s477
      $region60: #{vgg_block.2} parent=47 // pred_fallthru
        _
    $region48: #{vgg_block.2} parent=5 // pred_fallthru
      _
  $region6: #{vgg_block.2} parent=0 // loop_footer
    %s16 = sadd.s32 1, %s12
  $region7: #{vgg_block.2} parent=0 // loop_footer_branch
    %11 = sbr.rel target = $region3
  $region8: #{vgg_block.2} parent=0 // loop_exit
    _

</llo_original>
